<compile_context>
chip_gen: v6e
topology: v6e:2x2x1
jax: 0.10.0
libtpu: 0.0.40
codegen_flags: <defaults>
</compile_context>

<pallas_src>
import numpy as np
import jax
import jax.numpy as jnp
from jax.experimental import pallas as pl
from jax.experimental.pallas import tpu as pltpu

LANE = 128
SUBLANE = 8


def round_up(x, m):
    return ((x + m - 1) // m) * m


# ----------------------------------------------------------------------------
# Pallas kernel: the whole N-BEATS network (all stacks / blocks) in one call.
# grid = (batch_tiles ["parallel"], total_blocks ["arbitrary"]).
# ----------------------------------------------------------------------------
def make_nbeats_kernel(n_layers: int, Lpad: int):
    n_w = 2 * (n_layers + 1)  # (W, b) per FC layer + fused (W_head, b_head)

    def kernel(*refs):
        # scalar-prefetch refs (SMEM), then inputs, output, scratch
        last_ref = refs[1]                 # refs[0] (widx) only feeds index_maps
        x_ref = refs[2]
        w_refs = refs[3:3 + n_w]
        acc_ref = refs[3 + n_w]            # running total forecast (VMEM-resident)
        resid = refs[4 + n_w]              # VMEM scratch: residual

        blk = pl.program_id(1)

        @pl.when(blk == 0)
        def _init():
            resid[...] = x_ref[...]
            acc_ref[...] = jnp.zeros_like(acc_ref)

        # FC stack (Linear + ReLU), unrolled at trace time.
        # bf16 operands, fp32 MXU accumulation.
        h = resid[...]
        for l in range(n_layers):
            W = w_refs[2 * l][...]
            b = w_refs[2 * l + 1][...]
            h = jnp.dot(h.astype(W.dtype), W, preferred_element_type=jnp.float32)
            h = jnp.maximum(h + b, 0.0)

        # Fused head: one matmul producing [backcast | forecast] lanes.
        Wh = w_refs[2 * n_layers][...]
        bh = w_refs[2 * n_layers + 1][...]
        out = jnp.dot(h.astype(Wh.dtype), Wh,
                      preferred_element_type=jnp.float32) + bh
        backcast = out[:, :Lpad]           # lane-aligned split (Lpad % 128 == 0)
        forecast = out[:, Lpad:]

        acc_ref[...] = acc_ref[...] + forecast

        is_last = last_ref[blk]            # 1 iff last block of its stack

        @pl.when(is_last == 0)
        def _in_stack():
            resid[...] = resid[...] - backcast

        @pl.when(is_last == 1)
        def _stack_boundary():
            # N_beats.forward passes the LAST block's backcast to the next stack.
            resid[...] = backcast

    return kernel


def choose_tb(B, Lpad, Hpad, Hdpad, w_bytes, target=256, budget=40 << 20):
    """Batch tile: big enough to feed the MXU M dimension, at least two tiles
    when the batch allows it (both v7x TensorCores on the 'parallel' axis),
    shrunk if the VMEM estimate blows the budget."""
    b8 = round_up(max(B, 1), SUBLANE)
    n_tiles = max(-(-b8 // target), 2 if b8 >= 2 * SUBLANE else 1)
    tb = round_up(-(-b8 // n_tiles), SUBLANE)

    def vmem_est(t):
        # double-buffered x/out + resid scratch + matmul temps + 2x weight set
        return t * 4 * (4 * Lpad + 4 * Hpad + 2 * Hdpad) + 2 * w_bytes

    while tb > SUBLANE and vmem_est(tb) > budget:
        tb = round_up(tb // 2, SUBLANE)
    return tb, vmem_est(tb)


def nbeats_forward_pallas(x, model):
    backcast, horizon = model["backcast"], model["horizon"]
    Lpad, Hpad, Hdpad = model["Lpad"], model["Hpad"], model["Hdpad"]
    weights = model["weights"]
    widx, last = model["widx"], model["last"]
    n_layers = model["n_layers"]
    total_blocks = int(widx.shape[0])

    B = x.shape[0]
    w_bytes = sum(int(np.prod(w.shape[1:])) * w.dtype.itemsize for w in weights)
    tb, vmem_est = choose_tb(B, Lpad, Hpad, Hdpad, w_bytes)
    Bpad = round_up(max(B, 1), tb)
    x_pad = jnp.zeros((Bpad, Lpad), jnp.float32).at[:B, :backcast].set(
        x.astype(jnp.float32))

    grid = (Bpad // tb, total_blocks)

    def bmap(bi, blk, widx_ref, last_ref):
        return (bi, 0)

    def wmap(bi, blk, widx_ref, last_ref):
        return (widx_ref[blk], 0, 0)

    in_specs = [pl.BlockSpec((tb, Lpad), bmap)]
    for w in weights:
        in_specs.append(pl.BlockSpec((None,) + w.shape[1:], wmap))
    out_specs = pl.BlockSpec((tb, Hpad), bmap)

    vmem_limit = max(32 << 20, min(int(1.5 * vmem_est), 64 << 20))

    kernel = make_nbeats_kernel(n_layers, Lpad)
    out = pl.pallas_call(
        kernel,
        out_shape=jax.ShapeDtypeStruct((Bpad, Hpad), jnp.float32),
        grid_spec=pltpu.PrefetchScalarGridSpec(
            num_scalar_prefetch=2,
            grid=grid,
            in_specs=in_specs,
            out_specs=out_specs,
            scratch_shapes=[pltpu.VMEM((tb, Lpad), jnp.float32)]),
        compiler_params=pltpu.CompilerParams(
            dimension_semantics=("parallel", "arbitrary"),
            vmem_limit_bytes=vmem_limit),
    )(widx, last, x_pad, *weights)
    return out[:B, :horizon]


# ----------------------------------------------------------------------------
# Parameter / basis construction (mirrors torch __init__)
# ----------------------------------------------------------------------------
def theta_dims(basis_type, backcast, horizon, degree):
    if basis_type == "generic":
        return backcast, horizon
    if basis_type == "fourier":
        return 2 * (backcast // 2 - 1), 2 * (horizon // 2 - 1)
    return degree + 1, degree + 1  # chebyshev / polynomial


def make_basis_buffers(basis_type, backcast, horizon, degree):
    if basis_type == "generic":
        return [jnp.full((1, 1), 0.01, jnp.float32),
                jnp.full((1, 1), 0.01, jnp.float32),
                jnp.zeros((1, backcast), jnp.float32),
                jnp.zeros((1, horizon), jnp.float32)]
    if basis_type == "fourier":
        def fourier(L):
            H = L // 2 - 1
            t = np.arange(L, dtype=np.float32) / L
            basis = np.zeros((2 * H, L), np.float32)
            for l in range(1, H + 1):
                basis[2 * (l - 1), :] = np.cos(2 * np.pi * l * t)
                basis[2 * (l - 1) + 1, :] = np.sin(2 * np.pi * l * t)
            return basis
        return [jnp.asarray(fourier(backcast)), jnp.asarray(fourier(horizon))]
    if basis_type == "chebyshev":
        def cheb(L):
            t = np.linspace(-1, 1, L)
            basis = np.zeros((degree + 1, L), np.float32)
            basis[0, :] = 1.0
            if degree >= 1:
                basis[1, :] = t
            for n in range(2, degree + 1):
                basis[n, :] = 2 * t * basis[n - 1, :] - basis[n - 2, :]
            return basis
        return [jnp.asarray(cheb(backcast)), jnp.asarray(cheb(horizon))]
    # polynomial
    def poly(L):
        t = np.linspace(0, 1, L + 1)[:-1]
        return np.stack([t ** i for i in range(degree + 1)]).astype(np.float32)
    return [jnp.asarray(poly(backcast)), jnp.asarray(poly(horizon))]


def init_block_params(key, input_size, hidden, n_layers, basis_type,
                      backcast, horizon, degree):
    """kaiming_normal_(fan_in, relu): std = sqrt(2/fan_in); biases zero.
       Weights stored transposed: (in_features, out_features)."""
    params = []
    fan_in = input_size
    for _ in range(n_layers):
        key, sub = jax.random.split(key)
        W = (jax.random.normal(sub, (fan_in, hidden), jnp.float32)
             * np.sqrt(2.0 / fan_in))
        params += [W, jnp.zeros((1, hidden), jnp.float32)]
        fan_in = hidden
    tb_dim, tf_dim = theta_dims(basis_type, backcast, horizon, degree)
    key, s1, s2 = jax.random.split(key, 3)
    Wtb = jax.random.normal(s1, (hidden, tb_dim), jnp.float32) * np.sqrt(2.0 / hidden)
    Wtf = jax.random.normal(s2, (hidden, tf_dim), jnp.float32) * np.sqrt(2.0 / hidden)
    params += [Wtb, jnp.zeros((1, tb_dim), jnp.float32),
               Wtf, jnp.zeros((1, tf_dim), jnp.float32)]
    params += make_basis_buffers(basis_type, backcast, horizon, degree)
    return params, key


def fold_and_pad(raw, n_layers, n_layers_max, basis_type, backcast, horizon,
                 hidden, Lpad, Hpad, Hdpad, w_dtype):
    """Fold theta heads into the basis, concat back/fore heads, zero-pad every
    lane dim to a multiple of 128, pad missing FC layers with identity (a
    no-op after ReLU since h >= 0) so all blocks share one uniform layout."""
    HI = jax.lax.Precision.HIGHEST
    idx = 0
    padded = []
    for l in range(n_layers):
        W, b = raw[idx], raw[idx + 1]
        idx += 2
        in_pad = Lpad if l == 0 else Hdpad
        Wp = jnp.zeros((in_pad, Hdpad), jnp.float32)
        Wp = Wp.at[:W.shape[0], :W.shape[1]].set(W)
        bp = jnp.zeros((1, Hdpad), jnp.float32).at[:, :b.shape[1]].set(b)
        padded += [Wp.astype(w_dtype), bp]
    for _ in range(n_layers, n_layers_max):
        padded += [jnp.eye(Hdpad, dtype=jnp.float32).astype(w_dtype),
                   jnp.zeros((1, Hdpad), jnp.float32)]

    Wtb, btb, Wtf, btf = raw[idx:idx + 4]
    idx += 4
    if basis_type == "generic":
        basis_b, basis_f, b_b, b_f = raw[idx:idx + 4]
        W_back = Wtb * basis_b[0, 0]
        b_back = btb * basis_b[0, 0] + b_b
        W_fore = Wtf * basis_f[0, 0]
        b_fore = btf * basis_f[0, 0] + b_f
    else:
        back_basis, fore_basis = raw[idx:idx + 2]
        W_back = jnp.dot(Wtb, back_basis, precision=HI)
        b_back = jnp.dot(btb, back_basis, precision=HI)
        W_fore = jnp.dot(Wtf, fore_basis, precision=HI)
        b_fore = jnp.dot(btf, fore_basis, precision=HI)

    Wh = jnp.zeros((Hdpad, Lpad + Hpad), jnp.float32)
    Wh = Wh.at[:hidden, :backcast].set(W_back)
    Wh = Wh.at[:hidden, Lpad:Lpad + horizon].set(W_fore)
    bh = jnp.zeros((1, Lpad + Hpad), jnp.float32)
    bh = bh.at[:, :backcast].set(b_back)
    bh = bh.at[:, Lpad:Lpad + horizon].set(b_fore)
    padded += [Wh.astype(w_dtype), bh]
    return padded


def build_model(stack_configs, backcast, horizon, key,
                weight_dtype=jnp.bfloat16):
    Lpad = round_up(backcast, LANE)
    Hpad = round_up(horizon, LANE)
    n_layers_max = max(cfg.get("n_layers_per_block", 4) for cfg in stack_configs)
    hidden_max = max(cfg.get("hidden_size", 512) for cfg in stack_configs)
    Hdpad = round_up(hidden_max, LANE)

    folded_sets = []     # one entry per unique weight set (shared blocks share)
    widx, last = [], []  # per global-block metadata (scalar prefetch)
    stacks_ref = []      # raw per-block params for the pure-JAX reference
    for cfg in stack_configs:
        n_blocks = cfg["n_blocks"]
        basis_type = cfg["basis_type"]
        n_layers = cfg.get("n_layers_per_block", 4)
        hidden = cfg.get("hidden_size", 512)
        degree = cfg.get("degree", 3)
        share = cfg.get("share_weights", True)
        if n_blocks <= 0:
            raise ValueError("Number of blocks must be greater than 0")
        if n_layers < 1:
            raise ValueError("n_layers_per_block must be >= 1 for the fused kernel")

        n_sets = 1 if share else n_blocks
        raw_sets = []
        for _ in range(n_sets):
            raw, key = init_block_params(key, backcast, hidden, n_layers,
                                         basis_type, backcast, horizon, degree)
            raw_sets.append(raw)
            folded_sets.append(fold_and_pad(raw, n_layers, n_layers_max,
                                            basis_type, backcast, horizon,
                                            hidden, Lpad, Hpad, Hdpad,
                                            weight_dtype))
        base = len(folded_sets) - n_sets
        for b in range(n_blocks):
            widx.append(base if share else base + b)
            last.append(1 if b == n_blocks - 1 else 0)

        raw_blocks = [raw_sets[0]] * n_blocks if share else raw_sets
        stacks_ref.append(dict(raw_blocks=raw_blocks, n_layers=n_layers,
                               basis_type=basis_type))

    # Stack each weight slot along a leading "weight set" axis.
    n_w = 2 * (n_layers_max + 1)
    weights = [jnp.stack([s[i] for s in folded_sets], axis=0)
               for i in range(n_w)]

    model = dict(weights=weights,
                 widx=jnp.asarray(widx, jnp.int32),
                 last=jnp.asarray(last, jnp.int32),
                 n_layers=n_layers_max, backcast=backcast, horizon=horizon,
                 Lpad=Lpad, Hpad=Hpad, Hdpad=Hdpad, stacks_ref=stacks_ref)
    return model, key


# ----------------------------------------------------------------------------
# Pure-JAX reference (mirrors torch forward at HIGHEST precision)
# ----------------------------------------------------------------------------
def block_ref(x, raw, n_layers, basis_type):
    HI = jax.lax.Precision.HIGHEST
    idx = 0
    h = x
    for _ in range(n_layers):
        W, b = raw[idx], raw[idx + 1]
        idx += 2
        h = jnp.maximum(jnp.dot(h, W, precision=HI) + b, 0.0)
    Wtb, btb, Wtf, btf = raw[idx:idx + 4]
    idx += 4
    theta_b = jnp.dot(h, Wtb, precision=HI) + btb
    theta_f = jnp.dot(h, Wtf, precision=HI) + btf
    if basis_type == "generic":
        basis_b, basis_f, b_b, b_f = raw[idx:idx + 4]
        backcast = theta_b * basis_b[0, 0] + b_b
        forecast = theta_f * basis_f[0, 0] + b_f
    else:
        back_basis, fore_basis = raw[idx:idx + 2]
        backcast = jnp.dot(theta_b, back_basis, precision=HI)
        forecast = jnp.dot(theta_f, fore_basis, precision=HI)
    return forecast, backcast


def nbeats_forward_ref(x, stacks_ref, horizon):
    residual = x
    total = jnp.zeros((x.shape[0], horizon), jnp.float32)
    for st in stacks_ref:
        stack_fc = jnp.zeros((x.shape[0], horizon), jnp.float32)
        r = residual
        bc = None
        for raw in st["raw_blocks"]:
            fc, bc = block_ref(r, raw, st["n_layers"], st["basis_type"])
            stack_fc = stack_fc + fc
            r = r - bc
        total = total + stack_fc
        residual = bc   # original torch code: last block's backcast
    return total


# ----------------------------------------------------------------------------
if __name__ == "__main__":
    BATCH = 4
    BACKCAST = 16
    HORIZON = 8
    HIDDEN = 32
    N_LAYERS = 2
    DEGREE = 3

    stack_configs = [
        {"n_blocks": 2, "basis_type": "generic", "n_layers_per_block": N_LAYERS,
         "hidden_size": HIDDEN, "share_weights": True},
        {"n_blocks": 1, "basis_type": "fourier", "n_layers_per_block": N_LAYERS,
         "hidden_size": HIDDEN, "share_weights": True},
        {"n_blocks": 1, "basis_type": "chebyshev", "n_layers_per_block": N_LAYERS,
         "hidden_size": HIDDEN, "degree": DEGREE, "share_weights": True},
        {"n_blocks": 2, "basis_type": "polynomial", "n_layers_per_block": N_LAYERS,
         "hidden_size": HIDDEN, "degree": DEGREE, "share_weights": False},
    ]

    key = jax.random.PRNGKey(0)
    key, xkey = jax.random.split(key)
    x = jax.random.normal(xkey, (BATCH, BACKCAST), jnp.float32)

    model, key = build_model(stack_configs, BACKCAST, HORIZON, key)

    out_pallas = jax.block_until_ready(nbeats_forward_pallas(x, model))
    out_ref = jax.block_until_ready(
        nbeats_forward_ref(x, model["stacks_ref"], HORIZON))

    # bf16 weights/activations on the MXU (fp32 accumulation) + head/basis
    # folding vs. an fp32 HIGHEST-precision reference => relaxed tolerance
    # (intentional; see review notes).
    np.testing.assert_allclose(np.asarray(out_pallas), np.asarray(out_ref),
                               rtol=5e-2, atol=5e-2)
    assert out_pallas.shape == (BATCH, HORIZON)
    print("KERNEL_OK")
</pallas_src>

<mosaic_0001>
module attributes {stable_mosaic.version = 11 : i64} {
  func.func @kernel(%arg0: i32, %arg1: i32, %arg2: memref<6xi32, #tpu.memory_space<smem>>, %arg3: memref<6xi32, #tpu.memory_space<smem>>, %arg4: memref<8x128xf32, #tpu.memory_space<vmem>>, %arg5: memref<1x128x128xbf16, #tpu.memory_space<vmem>>, %arg6: memref<1x1x128xf32, #tpu.memory_space<vmem>>, %arg7: memref<1x128x128xbf16, #tpu.memory_space<vmem>>, %arg8: memref<1x1x128xf32, #tpu.memory_space<vmem>>, %arg9: memref<1x128x256xbf16, #tpu.memory_space<vmem>>, %arg10: memref<1x1x256xf32, #tpu.memory_space<vmem>>, %arg11: memref<8x128xf32, #tpu.memory_space<vmem>>, %arg12: memref<8x128xf32, #tpu.memory_space<vmem>>) attributes {dimension_semantics = [#tpu.dimension_semantics<parallel>, #tpu.dimension_semantics<arbitrary>], iteration_bounds = array<i64: 1, 6>, scalar_prefetch = 2 : i64, scratch_operands = 1 : i64, tpu.core_type = #tpu.core_type<tc>, window_params = [{transform_indices = @transform_0, window_bounds = array<i64: 8, 128>}, {transform_indices = @transform_1, window_bounds = array<i64: 1, 128, 128>}, {transform_indices = @transform_2, window_bounds = array<i64: 1, 1, 128>}, {transform_indices = @transform_3, window_bounds = array<i64: 1, 128, 128>}, {transform_indices = @transform_4, window_bounds = array<i64: 1, 1, 128>}, {transform_indices = @transform_5, window_bounds = array<i64: 1, 128, 256>}, {transform_indices = @transform_6, window_bounds = array<i64: 1, 1, 256>}, {transform_indices = @transform_7, window_bounds = array<i64: 8, 128>}]} {
    %c0_i32 = arith.constant 0 : i32
    %0 = arith.cmpi eq, %arg1, %c0_i32 : i32
    %1 = arith.extui %0 : i1 to i32
    %c0_i32_0 = arith.constant 0 : i32
    %2 = arith.cmpi ne, %1, %c0_i32_0 : i32
    scf.if %2 {
      %c0_31 = arith.constant 0 : index
      %c0_32 = arith.constant 0 : index
      %45 = vector.load %arg4[%c0_31, %c0_32] : memref<8x128xf32, #tpu.memory_space<vmem>>, vector<8x128xf32>
      %c0_33 = arith.constant 0 : index
      %c0_34 = arith.constant 0 : index
      %46 = vector.load %arg12[%c0_33, %c0_34] : memref<8x128xf32, #tpu.memory_space<vmem>>, vector<8x128xf32>
      tpu.vector_store %arg12[%c0_33, %c0_34], %45 {strides = array<i32>} : memref<8x128xf32, #tpu.memory_space<vmem>>, vector<8x128xf32>,
      %cst_35 = arith.constant 0.000000e+00 : f32
      %47 = vector.broadcast %cst_35 : f32 to vector<8x128xf32>
      %c0_36 = arith.constant 0 : index
      %c0_37 = arith.constant 0 : index
      %48 = vector.load %arg11[%c0_36, %c0_37] : memref<8x128xf32, #tpu.memory_space<vmem>>, vector<8x128xf32>
      tpu.vector_store %arg11[%c0_36, %c0_37], %47 {strides = array<i32>} : memref<8x128xf32, #tpu.memory_space<vmem>>, vector<8x128xf32>,
    } else {
    }
    %c0 = arith.constant 0 : index
    %c0_1 = arith.constant 0 : index
    %3 = vector.load %arg12[%c0, %c0_1] : memref<8x128xf32, #tpu.memory_space<vmem>>, vector<8x128xf32>
    %c0_2 = arith.constant 0 : index
    %c0_3 = arith.constant 0 : index
    %c0_4 = arith.constant 0 : index
    %4 = vector.load %arg5[%c0_2, %c0_3, %c0_4] : memref<1x128x128xbf16, #tpu.memory_space<vmem>>, vector<1x128x128xbf16>
    %5 = vector.shape_cast %4 : vector<1x128x128xbf16> to vector<128x128xbf16>
    %c0_5 = arith.constant 0 : index
    %c0_6 = arith.constant 0 : index
    %c0_7 = arith.constant 0 : index
    %6 = vector.load %arg6[%c0_5, %c0_6, %c0_7] : memref<1x1x128xf32, #tpu.memory_space<vmem>>, vector<1x1x128xf32>
    %7 = vector.shape_cast %6 : vector<1x1x128xf32> to vector<1x128xf32>
    %8 = arith.truncf %3 : vector<8x128xf32> to vector<8x128xbf16>
    %cst = arith.constant dense<0.000000e+00> : vector<8x128xf32>
    %9 = tpu.matmul %8, %5, %cst {dimension_numbers = #tpu.dot_dimension_numbers<[1], [0], [0], [1], [0, 0, 1, 1], [], []>} : vector<8x128xbf16>, vector<128x128xbf16>, vector<8x128xf32> -> vector<8x128xf32>
    %10 = vector.broadcast %7 : vector<1x128xf32> to vector<8x128xf32>
    %11 = arith.addf %9, %10 : vector<8x128xf32>
    %cst_8 = arith.constant 0.000000e+00 : f32
    %12 = vector.broadcast %cst_8 : f32 to vector<8x128xf32>
    %13 = arith.maximumf %11, %12 : vector<8x128xf32>
    %c0_9 = arith.constant 0 : index
    %c0_10 = arith.constant 0 : index
    %c0_11 = arith.constant 0 : index
    %14 = vector.load %arg7[%c0_9, %c0_10, %c0_11] : memref<1x128x128xbf16, #tpu.memory_space<vmem>>, vector<1x128x128xbf16>
    %15 = vector.shape_cast %14 : vector<1x128x128xbf16> to vector<128x128xbf16>
    %c0_12 = arith.constant 0 : index
    %c0_13 = arith.constant 0 : index
    %c0_14 = arith.constant 0 : index
    %16 = vector.load %arg8[%c0_12, %c0_13, %c0_14] : memref<1x1x128xf32, #tpu.memory_space<vmem>>, vector<1x1x128xf32>
    %17 = vector.shape_cast %16 : vector<1x1x128xf32> to vector<1x128xf32>
    %18 = arith.truncf %13 : vector<8x128xf32> to vector<8x128xbf16>
    %cst_15 = arith.constant dense<0.000000e+00> : vector<8x128xf32>
    %19 = tpu.matmul %18, %15, %cst_15 {dimension_numbers = #tpu.dot_dimension_numbers<[1], [0], [0], [1], [0, 0, 1, 1], [], []>} : vector<8x128xbf16>, vector<128x128xbf16>, vector<8x128xf32> -> vector<8x128xf32>
    %20 = vector.broadcast %17 : vector<1x128xf32> to vector<8x128xf32>
    %21 = arith.addf %19, %20 : vector<8x128xf32>
    %cst_16 = arith.constant 0.000000e+00 : f32
    %22 = vector.broadcast %cst_16 : f32 to vector<8x128xf32>
    %23 = arith.maximumf %21, %22 : vector<8x128xf32>
    %c0_17 = arith.constant 0 : index
    %c0_18 = arith.constant 0 : index
    %c0_19 = arith.constant 0 : index
    %24 = vector.load %arg9[%c0_17, %c0_18, %c0_19] : memref<1x128x256xbf16, #tpu.memory_space<vmem>>, vector<1x128x256xbf16>
    %25 = vector.shape_cast %24 : vector<1x128x256xbf16> to vector<128x256xbf16>
    %c0_20 = arith.constant 0 : index
    %c0_21 = arith.constant 0 : index
    %c0_22 = arith.constant 0 : index
    %26 = vector.load %arg10[%c0_20, %c0_21, %c0_22] : memref<1x1x256xf32, #tpu.memory_space<vmem>>, vector<1x1x256xf32>
    %27 = vector.shape_cast %26 : vector<1x1x256xf32> to vector<1x256xf32>
    %28 = arith.truncf %23 : vector<8x128xf32> to vector<8x128xbf16>
    %cst_23 = arith.constant dense<0.000000e+00> : vector<8x256xf32>
    %29 = tpu.matmul %28, %25, %cst_23 {dimension_numbers = #tpu.dot_dimension_numbers<[1], [0], [0], [1], [0, 0, 1, 1], [], []>} : vector<8x128xbf16>, vector<128x256xbf16>, vector<8x256xf32> -> vector<8x256xf32>
    %30 = vector.broadcast %27 : vector<1x256xf32> to vector<8x256xf32>
    %31 = arith.addf %29, %30 : vector<8x256xf32>
    %32 = vector.extract_strided_slice %31 {offsets = [0, 0], sizes = [8, 128], strides = [1, 1]} : vector<8x256xf32> to vector<8x128xf32>
    %33 = vector.extract_strided_slice %31 {offsets = [0, 128], sizes = [8, 128], strides = [1, 1]} : vector<8x256xf32> to vector<8x128xf32>
    %c0_24 = arith.constant 0 : index
    %c0_25 = arith.constant 0 : index
    %34 = vector.load %arg11[%c0_24, %c0_25] : memref<8x128xf32, #tpu.memory_space<vmem>>, vector<8x128xf32>
    %35 = arith.addf %34, %33 : vector<8x128xf32>
    %c0_26 = arith.constant 0 : index
    %c0_27 = arith.constant 0 : index
    %36 = vector.load %arg11[%c0_26, %c0_27] : memref<8x128xf32, #tpu.memory_space<vmem>>, vector<8x128xf32>
    tpu.vector_store %arg11[%c0_26, %c0_27], %35 {strides = array<i32>} : memref<8x128xf32, #tpu.memory_space<vmem>>, vector<8x128xf32>,
    %37 = arith.index_cast %arg1 : i32 to index
    %38 = memref.load %arg3[%37] : memref<6xi32, #tpu.memory_space<smem>>
    %c0_i32_28 = arith.constant 0 : i32
    %39 = arith.cmpi eq, %38, %c0_i32_28 : i32
    %40 = arith.extui %39 : i1 to i32
    %c0_i32_29 = arith.constant 0 : i32
    %41 = arith.cmpi ne, %40, %c0_i32_29 : i32
    scf.if %41 {
      %c0_31 = arith.constant 0 : index
      %c0_32 = arith.constant 0 : index
      %45 = vector.load %arg12[%c0_31, %c0_32] : memref<8x128xf32, #tpu.memory_space<vmem>>, vector<8x128xf32>
      %46 = arith.subf %45, %32 : vector<8x128xf32>
      %c0_33 = arith.constant 0 : index
      %c0_34 = arith.constant 0 : index
      %47 = vector.load %arg12[%c0_33, %c0_34] : memref<8x128xf32, #tpu.memory_space<vmem>>, vector<8x128xf32>
      tpu.vector_store %arg12[%c0_33, %c0_34], %46 {strides = array<i32>} : memref<8x128xf32, #tpu.memory_space<vmem>>, vector<8x128xf32>,
    } else {
    }
    %c1_i32 = arith.constant 1 : i32
    %42 = arith.cmpi eq, %38, %c1_i32 : i32
    %43 = arith.extui %42 : i1 to i32
    %c0_i32_30 = arith.constant 0 : i32
    %44 = arith.cmpi ne, %43, %c0_i32_30 : i32
    scf.if %44 {
      %c0_31 = arith.constant 0 : index
      %c0_32 = arith.constant 0 : index
      %45 = vector.load %arg12[%c0_31, %c0_32] : memref<8x128xf32, #tpu.memory_space<vmem>>, vector<8x128xf32>
      tpu.vector_store %arg12[%c0_31, %c0_32], %32 {strides = array<i32>} : memref<8x128xf32, #tpu.memory_space<vmem>>, vector<8x128xf32>,
    } else {
    }
    return
  }
  func.func @transform_0(%arg0: i32, %arg1: i32, %arg2: memref<6xi32, #tpu.memory_space<smem>>, %arg3: memref<6xi32, #tpu.memory_space<smem>>) -> (i32, i32) {
    %c0_i32 = arith.constant 0 : i32
    %c0_i32_0 = arith.constant 0 : i32
    return %arg0, %c0_i32 : i32, i32
  }
  func.func @transform_1(%arg0: i32, %arg1: i32, %arg2: memref<6xi32, #tpu.memory_space<smem>>, %arg3: memref<6xi32, #tpu.memory_space<smem>>) -> (i32, i32, i32) {
    %0 = arith.index_cast %arg1 : i32 to index
    %1 = memref.load %arg2[%0] : memref<6xi32, #tpu.memory_space<smem>>
    %c0_i32 = arith.constant 0 : i32
    %c0_i32_0 = arith.constant 0 : i32
    %c0_i32_1 = arith.constant 0 : i32
    return %1, %c0_i32, %c0_i32_0 : i32, i32, i32
  }
  func.func @transform_2(%arg0: i32, %arg1: i32, %arg2: memref<6xi32, #tpu.memory_space<smem>>, %arg3: memref<6xi32, #tpu.memory_space<smem>>) -> (i32, i32, i32) {
    %0 = arith.index_cast %arg1 : i32 to index
    %1 = memref.load %arg2[%0] : memref<6xi32, #tpu.memory_space<smem>>
    %c0_i32 = arith.constant 0 : i32
    %c0_i32_0 = arith.constant 0 : i32
    %c0_i32_1 = arith.constant 0 : i32
    return %1, %c0_i32, %c0_i32_0 : i32, i32, i32
  }
  func.func @transform_3(%arg0: i32, %arg1: i32, %arg2: memref<6xi32, #tpu.memory_space<smem>>, %arg3: memref<6xi32, #tpu.memory_space<smem>>) -> (i32, i32, i32) {
    %0 = arith.index_cast %arg1 : i32 to index
    %1 = memref.load %arg2[%0] : memref<6xi32, #tpu.memory_space<smem>>
    %c0_i32 = arith.constant 0 : i32
    %c0_i32_0 = arith.constant 0 : i32
    %c0_i32_1 = arith.constant 0 : i32
    return %1, %c0_i32, %c0_i32_0 : i32, i32, i32
  }
  func.func @transform_4(%arg0: i32, %arg1: i32, %arg2: memref<6xi32, #tpu.memory_space<smem>>, %arg3: memref<6xi32, #tpu.memory_space<smem>>) -> (i32, i32, i32) {
    %0 = arith.index_cast %arg1 : i32 to index
    %1 = memref.load %arg2[%0] : memref<6xi32, #tpu.memory_space<smem>>
    %c0_i32 = arith.constant 0 : i32
    %c0_i32_0 = arith.constant 0 : i32
    %c0_i32_1 = arith.constant 0 : i32
    return %1, %c0_i32, %c0_i32_0 : i32, i32, i32
  }
  func.func @transform_5(%arg0: i32, %arg1: i32, %arg2: memref<6xi32, #tpu.memory_space<smem>>, %arg3: memref<6xi32, #tpu.memory_space<smem>>) -> (i32, i32, i32) {
    %0 = arith.index_cast %arg1 : i32 to index
    %1 = memref.load %arg2[%0] : memref<6xi32, #tpu.memory_space<smem>>
    %c0_i32 = arith.constant 0 : i32
    %c0_i32_0 = arith.constant 0 : i32
    %c0_i32_1 = arith.constant 0 : i32
    return %1, %c0_i32, %c0_i32_0 : i32, i32, i32
  }
  func.func @transform_6(%arg0: i32, %arg1: i32, %arg2: memref<6xi32, #tpu.memory_space<smem>>, %arg3: memref<6xi32, #tpu.memory_space<smem>>) -> (i32, i32, i32) {
    %0 = arith.index_cast %arg1 : i32 to index
    %1 = memref.load %arg2[%0] : memref<6xi32, #tpu.memory_space<smem>>
    %c0_i32 = arith.constant 0 : i32
    %c0_i32_0 = arith.constant 0 : i32
    %c0_i32_1 = arith.constant 0 : i32
    return %1, %c0_i32, %c0_i32_0 : i32, i32, i32
  }
  func.func @transform_7(%arg0: i32, %arg1: i32, %arg2: memref<6xi32, #tpu.memory_space<smem>>, %arg3: memref<6xi32, #tpu.memory_space<smem>>) -> (i32, i32) {
    %c0_i32 = arith.constant 0 : i32
    %c0_i32_0 = arith.constant 0 : i32
    return %arg0, %c0_i32 : i32, i32
  }
}

</mosaic_0001>

<llo_original>
// kernel: tpu_custom_call.1
$region0: #{tpu_custom_call.1}
  #allocation0 [shape = 'u32[]', space=smem, size = 0x4, offset = 0x4, fixed_abs, tag = 'smem constant byte address 0x4 - core index']
  #allocation1 [shape = 'u32[144,128]{1,0:T(1,128)}', space=vmem, size = 0x12000, scoped, tag = 'internal scratch']
  #allocation2 [shape = 'f32[8,128]{1,0:T(8,128)}', space=vmem, size = 0x1000, scoped, tag = 'scratch operand']
  #allocation3 [shape = 's32[1]{0}', space=sflag, size = 0x4, scoped, tag = 'scoped memory for tpu_custom_call.1']
  #allocation4 [shape = 'u8[512]{0}', space=smem, size = 0x200, scoped, tag = 'prefetched SMEM operand 0']
  #allocation5 [shape = 'u8[512]{0}', space=smem, size = 0x200, scoped, tag = 'prefetched SMEM operand 1']
  %s0 = inlined_call_operand.hbm [shape: s32[6], index: 0, kind: input, shape index: {}]
  %s1 = inlined_call_operand.vmem [shape: s32[6], index: 1, kind: input, shape index: {}]
  %s2 = inlined_call_operand.hbm [shape: f32[8,128], index: 2, kind: input, shape index: {}]
  %s3 = inlined_call_operand.hbm [shape: bf16[5,128,128], index: 3, kind: input, shape index: {}]
  %s4 = inlined_call_operand.hbm [shape: f32[5,1,128], index: 4, kind: input, shape index: {}]
  %s5 = inlined_call_operand.hbm [shape: bf16[5,128,128], index: 5, kind: input, shape index: {}]
  %s6 = inlined_call_operand.hbm [shape: f32[5,1,128], index: 6, kind: input, shape index: {}]
  %s7 = inlined_call_operand.hbm [shape: bf16[5,128,256], index: 7, kind: input, shape index: {}]
  %s8 = inlined_call_operand.vmem [shape: f32[5,1,256], index: 8, kind: input, shape index: {}]
  %s9 = inlined_call_operand.hbm [shape: f32[8,128], index: 9, kind: output, shape index: {}]
  %s10 = sld [smem:[#allocation0]]
  $region97: #{tpu_custom_call.1} parent=0
    _
  %s12 = ssub.s32 1, %s10
  %s13 = scalar_select 0, %s12, %s10
  %15 = dma.hbm_to_smem %s0, 16, [#allocation4], [#allocation3]
  %s16 = sshll.u32 %s1, 4
  %s17 = int_to_ptr.vmem [resolvable:$true] %s16
  %19 = dma.vmem_to_smem %s17, 16, [#allocation5], [#allocation3]
  %20 = dma.done [#allocation3], 32
  %21 = sfence
  $region1: #{tpu_custom_call.1} parent=0
    #allocation6 [shape = 'u8[4096]{0}', space=vmem, size = 0x1000, scoped, tag = 'input window, operand 2, single buffered']
    #allocation7 [shape = 's32[2]{0}', space=sflag, size = 0x8, scoped, tag = 'scoped memory for tpu_custom_call.1']
    #allocation8 [shape = 's32[2]{0}', space=sflag, size = 0x8, scoped, tag = 'scoped memory for tpu_custom_call.1']
    #allocation9 [shape = 'u8[65536]{0}', space=vmem, size = 0x10000, scoped, tag = 'input window, operand 3']
    #allocation10 [shape = 's32[2]{0}', space=sflag, size = 0x8, scoped, tag = 'scoped memory for tpu_custom_call.1']
    #allocation11 [shape = 'u8[1024]{0}', space=vmem, size = 0x400, scoped, tag = 'input window, operand 4']
    #allocation12 [shape = 'u8[65536]{0}', space=vmem, size = 0x10000, scoped, tag = 'input window, operand 5']
    #allocation13 [shape = 's32[2]{0}', space=sflag, size = 0x8, scoped, tag = 'scoped memory for tpu_custom_call.1']
    #allocation14 [shape = 'u8[1024]{0}', space=vmem, size = 0x400, scoped, tag = 'input window, operand 6']
    #allocation15 [shape = 'u8[131072]{0}', space=vmem, size = 0x20000, scoped, tag = 'input window, operand 7']
    #allocation16 [shape = 's32[2]{0}', space=sflag, size = 0x8, scoped, tag = 'scoped memory for tpu_custom_call.1']
    #allocation17 [shape = 'u8[4096]{0}', space=vmem, size = 0x1000, scoped, tag = 'output window, operand 0, single buffered']
    %22 = vsyncpa [#allocation7], 0
    %23 = vsyncpa [#allocation10], 0
    %s24 = scalar_lea.sflag [#allocation10], 1
    %25 = vsyncpa %s24, 0
    %26 = vsyncpa [#allocation13], 0
    %s27 = scalar_lea.sflag [#allocation13], 1
    %28 = vsyncpa %s27, 0
    %29 = vsyncpa [#allocation16], 0
    %s30 = scalar_lea.sflag [#allocation16], 1
    %31 = vsyncpa %s30, 0
    %32 = vsyncpa [#allocation8], 0
    loop: start=0, step=1, limit=8
    $region2: #{tpu_custom_call.1} parent=1 // loop_pre_header
      _
    $region3: #{tpu_custom_call.1} parent=1 // loop_header
      %s34 = sphi 0, %s38
      %p35 = scmp.ge.s32.totalorder %s34, 8
      %s41 = sphi 0, %s53
      %s42 = sphi 0, %s49
      %s43 = sphi 0, %s41
      %s44 = sphi 0, %s42
      %s45 = sphi 0, %s43
      %s46 = sphi 0, %s44
      %s56 = sphi 0, %s58
      %s59 = sphi 0, %s56
      %s60 = sphi 0, %s59
      %s76 = sphi 0, %s60
      %s84 = sphi 0, %s86
      %s87 = sphi 0, %s84
      %s88 = sphi 0, %s87
      %s104 = sphi 0, %s88
      %s112 = sphi 0, %s114
      %s115 = sphi 0, %s112
      %s116 = sphi 0, %s115
      %s132 = sphi 0, %s116
      %s140 = sphi 0, %s142
      %s143 = sphi 0, %s140
      %s144 = sphi 0, %s143
      %s160 = sphi 0, %s144
      %s168 = sphi 0, %s170
      %s171 = sphi 0, %s168
      %s172 = sphi 0, %s171
      %s188 = sphi 0, %s172
      %s196 = sphi 0, %s198
      %s199 = sphi 0, %s196
      %s200 = sphi 0, %s199
      %s216 = sphi 0, %s200
      %s224 = sphi 0, %s226
      %s227 = sphi 0, %s224
      %s228 = sphi 0, %s227
      %s244 = sphi 0, %s228
      %s250 = sphi 0, %s252
      %s253 = sphi 0, %s250
      %s254 = sphi 0, %s253
      %s270 = sphi 0, %s254
    $region4: #{tpu_custom_call.1} parent=1 // loop_header_branch
      %37 = sbr.rel (%p35) target = $region8
    $region5: #{tpu_custom_call.1} parent=1 // loop_body
      %s39 = ssub.s32 %s34, 1
      %s40 = ssub.s32 %s34, 2
      %s47 = sadd.s32 1, %s42
      %p48 = scmp.ge.s32.totalorder %s47, 6
      %s49 = scalar_select %p48, 0, %s47
      %s50 = sadd.s32 1, %s41
      %s51 = scalar_select %p48, %s50, %s41
      %p52 = scmp.ge.s32.totalorder %s51, 1
      %s53 = scalar_select %p52, 0, %s51
      %s54 = ssub.s32 %s41, %s53
      %p55 = scmp.eq.s32.totalorder %s54, 0
      %s57 = sadd.s32 %s56, 1
      %s58 = scalar_select %p55, %s56, %s57
      %p61 = pneg %p55
      %p62 = scmp.eq.s32.totalorder %s34, 5
      %p63 = por %p61, %p62
      %p64 = scmp.ne.s32.totalorder %s56, %s59
      %p65 = scmp.eq.s32.totalorder %s34, 0
      %p66 = por %p64, %p65
      %p67 = scmp.ne.s32.totalorder %s56, %s59
      %p68 = scmp.eq.s32.totalorder %s39, 5
      %p69 = por %p67, %p68
      %p70 = scmp.ne.s32.totalorder %s59, %s60
      %p71 = scmp.eq.s32.totalorder %s39, 0
      %p72 = por %p70, %p71
      %p73 = scmp.ne.s32.totalorder %s59, %s60
      %p74 = scmp.eq.s32.totalorder %s40, 5
      %p75 = por %p73, %p74
      %p77 = scmp.ne.s32.totalorder %s60, %s76
      %p78 = scmp.eq.s32.totalorder %s40, 0
      %p79 = por %p77, %p78
      %s80 = sld [smem:[#allocation4 + %s42]]
      %s81 = sld [smem:[#allocation4 + %s49]]
      %s82 = ssub.s32 %s80, %s81
      %p83 = scmp.eq.s32.totalorder %s82, 0
      %s85 = sadd.s32 %s84, 1
      %s86 = scalar_select %p83, %s84, %s85
      %p89 = pneg %p83
      %p90 = scmp.eq.s32.totalorder %s34, 5
      %p91 = por %p89, %p90
      %p92 = scmp.ne.s32.totalorder %s84, %s87
      %p93 = scmp.eq.s32.totalorder %s34, 0
      %p94 = por %p92, %p93
      %p95 = scmp.ne.s32.totalorder %s84, %s87
      %p96 = scmp.eq.s32.totalorder %s39, 5
      %p97 = por %p95, %p96
      %p98 = scmp.ne.s32.totalorder %s87, %s88
      %p99 = scmp.eq.s32.totalorder %s39, 0
      %p100 = por %p98, %p99
      %p101 = scmp.ne.s32.totalorder %s87, %s88
      %p102 = scmp.eq.s32.totalorder %s40, 5
      %p103 = por %p101, %p102
      %p105 = scmp.ne.s32.totalorder %s88, %s104
      %p106 = scmp.eq.s32.totalorder %s40, 0
      %p107 = por %p105, %p106
      %s108 = sld [smem:[#allocation4 + %s42]]
      %s109 = sld [smem:[#allocation4 + %s49]]
      %s110 = ssub.s32 %s108, %s109
      %p111 = scmp.eq.s32.totalorder %s110, 0
      %s113 = sadd.s32 %s112, 1
      %s114 = scalar_select %p111, %s112, %s113
      %p117 = pneg %p111
      %p118 = scmp.eq.s32.totalorder %s34, 5
      %p119 = por %p117, %p118
      %p120 = scmp.ne.s32.totalorder %s112, %s115
      %p121 = scmp.eq.s32.totalorder %s34, 0
      %p122 = por %p120, %p121
      %p123 = scmp.ne.s32.totalorder %s112, %s115
      %p124 = scmp.eq.s32.totalorder %s39, 5
      %p125 = por %p123, %p124
      %p126 = scmp.ne.s32.totalorder %s115, %s116
      %p127 = scmp.eq.s32.totalorder %s39, 0
      %p128 = por %p126, %p127
      %p129 = scmp.ne.s32.totalorder %s115, %s116
      %p130 = scmp.eq.s32.totalorder %s40, 5
      %p131 = por %p129, %p130
      %p133 = scmp.ne.s32.totalorder %s116, %s132
      %p134 = scmp.eq.s32.totalorder %s40, 0
      %p135 = por %p133, %p134
      %s136 = sld [smem:[#allocation4 + %s42]]
      %s137 = sld [smem:[#allocation4 + %s49]]
      %s138 = ssub.s32 %s136, %s137
      %p139 = scmp.eq.s32.totalorder %s138, 0
      %s141 = sadd.s32 %s140, 1
      %s142 = scalar_select %p139, %s140, %s141
      %p145 = pneg %p139
      %p146 = scmp.eq.s32.totalorder %s34, 5
      %p147 = por %p145, %p146
      %p148 = scmp.ne.s32.totalorder %s140, %s143
      %p149 = scmp.eq.s32.totalorder %s34, 0
      %p150 = por %p148, %p149
      %p151 = scmp.ne.s32.totalorder %s140, %s143
      %p152 = scmp.eq.s32.totalorder %s39, 5
      %p153 = por %p151, %p152
      %p154 = scmp.ne.s32.totalorder %s143, %s144
      %p155 = scmp.eq.s32.totalorder %s39, 0
      %p156 = por %p154, %p155
      %p157 = scmp.ne.s32.totalorder %s143, %s144
      %p158 = scmp.eq.s32.totalorder %s40, 5
      %p159 = por %p157, %p158
      %p161 = scmp.ne.s32.totalorder %s144, %s160
      %p162 = scmp.eq.s32.totalorder %s40, 0
      %p163 = por %p161, %p162
      %s164 = sld [smem:[#allocation4 + %s42]]
      %s165 = sld [smem:[#allocation4 + %s49]]
      %s166 = ssub.s32 %s164, %s165
      %p167 = scmp.eq.s32.totalorder %s166, 0
      %s169 = sadd.s32 %s168, 1
      %s170 = scalar_select %p167, %s168, %s169
      %p173 = pneg %p167
      %p174 = scmp.eq.s32.totalorder %s34, 5
      %p175 = por %p173, %p174
      %p176 = scmp.ne.s32.totalorder %s168, %s171
      %p177 = scmp.eq.s32.totalorder %s34, 0
      %p178 = por %p176, %p177
      %p179 = scmp.ne.s32.totalorder %s168, %s171
      %p180 = scmp.eq.s32.totalorder %s39, 5
      %p181 = por %p179, %p180
      %p182 = scmp.ne.s32.totalorder %s171, %s172
      %p183 = scmp.eq.s32.totalorder %s39, 0
      %p184 = por %p182, %p183
      %p185 = scmp.ne.s32.totalorder %s171, %s172
      %p186 = scmp.eq.s32.totalorder %s40, 5
      %p187 = por %p185, %p186
      %p189 = scmp.ne.s32.totalorder %s172, %s188
      %p190 = scmp.eq.s32.totalorder %s40, 0
      %p191 = por %p189, %p190
      %s192 = sld [smem:[#allocation4 + %s42]]
      %s193 = sld [smem:[#allocation4 + %s49]]
      %s194 = ssub.s32 %s192, %s193
      %p195 = scmp.eq.s32.totalorder %s194, 0
      %s197 = sadd.s32 %s196, 1
      %s198 = scalar_select %p195, %s196, %s197
      %p201 = pneg %p195
      %p202 = scmp.eq.s32.totalorder %s34, 5
      %p203 = por %p201, %p202
      %p204 = scmp.ne.s32.totalorder %s196, %s199
      %p205 = scmp.eq.s32.totalorder %s34, 0
      %p206 = por %p204, %p205
      %p207 = scmp.ne.s32.totalorder %s196, %s199
      %p208 = scmp.eq.s32.totalorder %s39, 5
      %p209 = por %p207, %p208
      %p210 = scmp.ne.s32.totalorder %s199, %s200
      %p211 = scmp.eq.s32.totalorder %s39, 0
      %p212 = por %p210, %p211
      %p213 = scmp.ne.s32.totalorder %s199, %s200
      %p214 = scmp.eq.s32.totalorder %s40, 5
      %p215 = por %p213, %p214
      %p217 = scmp.ne.s32.totalorder %s200, %s216
      %p218 = scmp.eq.s32.totalorder %s40, 0
      %p219 = por %p217, %p218
      %s220 = sld [smem:[#allocation4 + %s42]]
      %s221 = sld [smem:[#allocation4 + %s49]]
      %s222 = ssub.s32 %s220, %s221
      %p223 = scmp.eq.s32.totalorder %s222, 0
      %s225 = sadd.s32 %s224, 1
      %s226 = scalar_select %p223, %s224, %s225
      %p229 = pneg %p223
      %p230 = scmp.eq.s32.totalorder %s34, 5
      %p231 = por %p229, %p230
      %p232 = scmp.ne.s32.totalorder %s224, %s227
      %p233 = scmp.eq.s32.totalorder %s34, 0
      %p234 = por %p232, %p233
      %p235 = scmp.ne.s32.totalorder %s224, %s227
      %p236 = scmp.eq.s32.totalorder %s39, 5
      %p237 = por %p235, %p236
      %p238 = scmp.ne.s32.totalorder %s227, %s228
      %p239 = scmp.eq.s32.totalorder %s39, 0
      %p240 = por %p238, %p239
      %p241 = scmp.ne.s32.totalorder %s227, %s228
      %p242 = scmp.eq.s32.totalorder %s40, 5
      %p243 = por %p241, %p242
      %p245 = scmp.ne.s32.totalorder %s228, %s244
      %p246 = scmp.eq.s32.totalorder %s40, 0
      %p247 = por %p245, %p246
      %s248 = ssub.s32 %s41, %s53
      %p249 = scmp.eq.s32.totalorder %s248, 0
      %s251 = sadd.s32 %s250, 1
      %s252 = scalar_select %p249, %s250, %s251
      %p255 = pneg %p249
      %p256 = scmp.eq.s32.totalorder %s34, 5
      %p257 = por %p255, %p256
      %p258 = scmp.ne.s32.totalorder %s250, %s253
      %p259 = scmp.eq.s32.totalorder %s34, 0
      %p260 = por %p258, %p259
      %p261 = scmp.ne.s32.totalorder %s250, %s253
      %p262 = scmp.eq.s32.totalorder %s39, 5
      %p263 = por %p261, %p262
      %p264 = scmp.ne.s32.totalorder %s253, %s254
      %p265 = scmp.eq.s32.totalorder %s39, 0
      %p266 = por %p264, %p265
      %p267 = scmp.ne.s32.totalorder %s253, %s254
      %p268 = scmp.eq.s32.totalorder %s40, 5
      %p269 = por %p267, %p268
      %p271 = scmp.ne.s32.totalorder %s254, %s270
      %p272 = scmp.eq.s32.totalorder %s40, 0
      %p273 = por %p271, %p272
      %p274 = scmp.le.s32.totalorder 1, %s34
      %p275 = scmp.lt.s32.totalorder %s34, 7
      %p276 = pnand %p274, %p275
      %p277 = pneg %p276
      // Predicated region
      $region9: #{tpu_custom_call.1} parent=5 // pred_check
        _
      $region10: #{tpu_custom_call.1} parent=5 // pred_check_branch
        %279 = sbr.rel (%p276) target = $region12
      $region11: #{tpu_custom_call.1} parent=5 // pred_region
        %s280 = ssub.s32 %s34, 1
        // Predicated region
        $region13: #{tpu_custom_call.1} parent=11 // pred_check
          %p281 = pneg %p72
        $region14: #{tpu_custom_call.1} parent=11 // pred_check_branch
          %283 = sbr.rel (%p281) target = $region16
        $region15: #{tpu_custom_call.1} parent=11 // pred_region
          %s285 = ssub.s32 128, 128
          %286 = vsyncadd [#allocation7], %s285
          %s287 = smul.addr %s43, 128
          %s288 = scalar_lea.hbm %s2, %s287
          %s290 = sshll.u32 [#allocation6], 4
          %s291 = int_to_ptr.vmem [resolvable:$true] %s290
          %293 = dma.hbm_to_vmem [thread:$0]  %s288, 128, %s291, [#allocation7]
        $region16: #{tpu_custom_call.1} parent=11 // pred_fallthru
          _
      $region12: #{tpu_custom_call.1} parent=5 // pred_fallthru
        _
      %p294 = scmp.lt.s32.totalorder %s34, 6
      // Predicated region
      $region17: #{tpu_custom_call.1} parent=5 // pred_check
        %p295 = pneg %p294
      $region18: #{tpu_custom_call.1} parent=5 // pred_check_branch
        %297 = sbr.rel (%p295) target = $region20
      $region19: #{tpu_custom_call.1} parent=5 // pred_region
        // Predicated region
        $region21: #{tpu_custom_call.1} parent=19 // pred_check
          %p298 = pneg %p94
        $region22: #{tpu_custom_call.1} parent=19 // pred_check_branch
          %300 = sbr.rel (%p298) target = $region24
        $region23: #{tpu_custom_call.1} parent=19 // pred_region
          %s301 = sand.u32 %s34, 1
          %s302 = scalar_lea.sflag [#allocation10], %s301
          %s303 = sand.u32 %s84, 1
          %s304 = smul.addr %s303, 64
          %s305 = scalar_lea.vmem [#allocation9], %s304
          %s306 = sld [smem:[#allocation4 + %s42]]
          %s308 = ssub.s32 1024, 1024
          %309 = vsyncadd %s302, %s308
          %s310 = smul.addr %s306, 16
          %s311 = smul.addr %s310, 64
          %s312 = scalar_lea.hbm %s3, %s311
          %s313 = sshll.u32 %s305, 4
          %s314 = int_to_ptr.vmem [resolvable:$true] %s313
          %319 = dma.hbm_to_vmem [thread:$0]  %s312, 1024, %s314, %s302, 64, 64, 4
        $region24: #{tpu_custom_call.1} parent=19 // pred_fallthru
          _
        // Predicated region
        $region25: #{tpu_custom_call.1} parent=19 // pred_check
          %p320 = pneg %p122
        $region26: #{tpu_custom_call.1} parent=19 // pred_check_branch
          %322 = sbr.rel (%p320) target = $region28
        $region27: #{tpu_custom_call.1} parent=19 // pred_region
          %s323 = sand.u32 %s34, 1
          %s324 = scalar_lea.sflag [#allocation10], %s323
          %s325 = sand.u32 %s112, 1
          %s326 = scalar_lea.vmem [#allocation11], %s325
          %s327 = sld [smem:[#allocation4 + %s42]]
          %s329 = ssub.s32 16, 16
          %330 = vsyncadd %s324, %s329
          %s331 = smul.addr %s327, 16
          %s332 = scalar_lea.hbm %s4, %s331
          %s334 = sshll.u32 %s326, 4
          %s335 = int_to_ptr.vmem [resolvable:$true] %s334
          %337 = dma.hbm_to_vmem [thread:$0]  %s332, 16, %s335, %s324
        $region28: #{tpu_custom_call.1} parent=19 // pred_fallthru
          _
        // Predicated region
        $region29: #{tpu_custom_call.1} parent=19 // pred_check
          %p338 = pneg %p150
        $region30: #{tpu_custom_call.1} parent=19 // pred_check_branch
          %340 = sbr.rel (%p338) target = $region32
        $region31: #{tpu_custom_call.1} parent=19 // pred_region
          %s341 = sand.u32 %s34, 1
          %s342 = scalar_lea.sflag [#allocation13], %s341
          %s343 = sand.u32 %s140, 1
          %s344 = smul.addr %s343, 64
          %s345 = scalar_lea.vmem [#allocation12], %s344
          %s346 = sld [smem:[#allocation4 + %s42]]
          %s348 = ssub.s32 1024, 1024
          %349 = vsyncadd %s342, %s348
          %s350 = smul.addr %s346, 16
          %s351 = smul.addr %s350, 64
          %s352 = scalar_lea.hbm %s5, %s351
          %s353 = sshll.u32 %s345, 4
          %s354 = int_to_ptr.vmem [resolvable:$true] %s353
          %359 = dma.hbm_to_vmem [thread:$0]  %s352, 1024, %s354, %s342, 64, 64, 4
        $region32: #{tpu_custom_call.1} parent=19 // pred_fallthru
          _
        // Predicated region
        $region33: #{tpu_custom_call.1} parent=19 // pred_check
          %p360 = pneg %p178
        $region34: #{tpu_custom_call.1} parent=19 // pred_check_branch
          %362 = sbr.rel (%p360) target = $region36
        $region35: #{tpu_custom_call.1} parent=19 // pred_region
          %s363 = sand.u32 %s34, 1
          %s364 = scalar_lea.sflag [#allocation13], %s363
          %s365 = sand.u32 %s168, 1
          %s366 = scalar_lea.vmem [#allocation14], %s365
          %s367 = sld [smem:[#allocation4 + %s42]]
          %s369 = ssub.s32 16, 16
          %370 = vsyncadd %s364, %s369
          %s371 = smul.addr %s367, 16
          %s372 = scalar_lea.hbm %s6, %s371
          %s374 = sshll.u32 %s366, 4
          %s375 = int_to_ptr.vmem [resolvable:$true] %s374
          %377 = dma.hbm_to_vmem [thread:$0]  %s372, 16, %s375, %s364
        $region36: #{tpu_custom_call.1} parent=19 // pred_fallthru
          _
        // Predicated region
        $region37: #{tpu_custom_call.1} parent=19 // pred_check
          %p378 = pneg %p206
        $region38: #{tpu_custom_call.1} parent=19 // pred_check_branch
          %380 = sbr.rel (%p378) target = $region40
        $region39: #{tpu_custom_call.1} parent=19 // pred_region
          %s381 = sand.u32 %s196, 1
          %s382 = scalar_lea.sflag [#allocation16], %s381
          %s383 = sand.u32 %s196, 1
          %s384 = smul.addr %s383, 128
          %s385 = scalar_lea.vmem [#allocation15], %s384
          %s386 = sld [smem:[#allocation4 + %s42]]
          %s388 = ssub.s32 2048, 2048
          %389 = vsyncadd %s382, %s388
          %s390 = smul.addr %s386, 32
          %s391 = smul.addr %s390, 64
          %s392 = scalar_lea.hbm %s7, %s391
          %s393 = sshll.u32 %s385, 4
          %s394 = int_to_ptr.vmem [resolvable:$true] %s393
          %399 = dma.hbm_to_vmem [thread:$0]  %s392, 2048, %s394, %s382, 128, 128, 8
        $region40: #{tpu_custom_call.1} parent=19 // pred_fallthru
          _
        // Predicated region
        $region41: #{tpu_custom_call.1} parent=19 // pred_check
          %p400 = pneg %p234
        $region42: #{tpu_custom_call.1} parent=19 // pred_check_branch
          %402 = sbr.rel (%p400) target = $region44
        $region43: #{tpu_custom_call.1} parent=19 // pred_region
          %s403 = sld [smem:[#allocation4 + %s42]]
          %p404 = scmp.lt.s32.totalorder %s403, 4
          %s405 = scalar_select %p404, %s403, 4
          %s406 = smul.addr %s405, 2
          %s407 = scalar_lea.vmem %s8, %s406
          %s408 = sld [smem:[#allocation4 + %s42]]
        $region44: #{tpu_custom_call.1} parent=19 // pred_fallthru
          _
      $region20: #{tpu_custom_call.1} parent=5 // pred_fallthru
        _
      %p409 = scmp.le.s32.totalorder 1, %s34
      %p410 = scmp.lt.s32.totalorder %s34, 7
      %p411 = pnand %p409, %p410
      %p412 = pneg %p411
      // Predicated region
      $region45: #{tpu_custom_call.1} parent=5 // pred_check
        _
      $region46: #{tpu_custom_call.1} parent=5 // pred_check_branch
        %414 = sbr.rel (%p411) target = $region48
      $region47: #{tpu_custom_call.1} parent=5 // pred_region
        %s415 = ssub.s32 %s34, 1
        // Predicated region
        $region49: #{tpu_custom_call.1} parent=47 // pred_check
          %p416 = pneg %p72
        $region50: #{tpu_custom_call.1} parent=47 // pred_check_branch
          %418 = sbr.rel (%p416) target = $region52
        $region51: #{tpu_custom_call.1} parent=47 // pred_region
          %419 = dma.done [#allocation7], 128
        $region52: #{tpu_custom_call.1} parent=47 // pred_fallthru
          _
        %s420 = sand.u32 %s39, 1
        %s421 = scalar_lea.sflag [#allocation10], %s420
        %s422 = sand.u32 %s87, 1
        %s423 = smul.addr %s422, 64
        %s424 = scalar_lea.vmem [#allocation9], %s423
        // Predicated region
        $region53: #{tpu_custom_call.1} parent=47 // pred_check
          %p425 = pneg %p100
        $region54: #{tpu_custom_call.1} parent=47 // pred_check_branch
          %427 = sbr.rel (%p425) target = $region56
        $region55: #{tpu_custom_call.1} parent=47 // pred_region
          %428 = dma.done %s421, 1024
        $region56: #{tpu_custom_call.1} parent=47 // pred_fallthru
          _
        %s429 = sand.u32 %s39, 1
        %s430 = scalar_lea.sflag [#allocation10], %s429
        %s431 = sand.u32 %s115, 1
        %s432 = scalar_lea.vmem [#allocation11], %s431
        // Predicated region
        $region57: #{tpu_custom_call.1} parent=47 // pred_check
          %p433 = pneg %p128
        $region58: #{tpu_custom_call.1} parent=47 // pred_check_branch
          %435 = sbr.rel (%p433) target = $region60
        $region59: #{tpu_custom_call.1} parent=47 // pred_region
          %436 = dma.done %s430, 16
        $region60: #{tpu_custom_call.1} parent=47 // pred_fallthru
          _
        %s437 = sand.u32 %s39, 1
        %s438 = scalar_lea.sflag [#allocation13], %s437
        %s439 = sand.u32 %s143, 1
        %s440 = smul.addr %s439, 64
        %s441 = scalar_lea.vmem [#allocation12], %s440
        // Predicated region
        $region61: #{tpu_custom_call.1} parent=47 // pred_check
          %p442 = pneg %p156
        $region62: #{tpu_custom_call.1} parent=47 // pred_check_branch
          %444 = sbr.rel (%p442) target = $region64
        $region63: #{tpu_custom_call.1} parent=47 // pred_region
          %445 = dma.done %s438, 1024
        $region64: #{tpu_custom_call.1} parent=47 // pred_fallthru
          _
        %s446 = sand.u32 %s39, 1
        %s447 = scalar_lea.sflag [#allocation13], %s446
        %s448 = sand.u32 %s171, 1
        %s449 = scalar_lea.vmem [#allocation14], %s448
        // Predicated region
        $region65: #{tpu_custom_call.1} parent=47 // pred_check
          %p450 = pneg %p184
        $region66: #{tpu_custom_call.1} parent=47 // pred_check_branch
          %452 = sbr.rel (%p450) target = $region68
        $region67: #{tpu_custom_call.1} parent=47 // pred_region
          %453 = dma.done %s447, 16
        $region68: #{tpu_custom_call.1} parent=47 // pred_fallthru
          _
        %s454 = sand.u32 %s199, 1
        %s455 = scalar_lea.sflag [#allocation16], %s454
        %s456 = sand.u32 %s199, 1
        %s457 = smul.addr %s456, 128
        %s458 = scalar_lea.vmem [#allocation15], %s457
        // Predicated region
        $region69: #{tpu_custom_call.1} parent=47 // pred_check
          %p459 = pneg %p212
        $region70: #{tpu_custom_call.1} parent=47 // pred_check_branch
          %461 = sbr.rel (%p459) target = $region72
        $region71: #{tpu_custom_call.1} parent=47 // pred_region
          %462 = dma.done %s455, 2048
        $region72: #{tpu_custom_call.1} parent=47 // pred_fallthru
          _
        %p463 = pneg %p72
        %p464 = pneg %p69
        %s465 = sand.u32 %s39, 1
        %s466 = scalar_lea.sflag [#allocation10], %s465
        %s467 = sand.u32 %s87, 1
        %s468 = smul.addr %s467, 64
        %s469 = scalar_lea.vmem [#allocation9], %s468
        %p470 = pneg %p100
        %p471 = pneg %p97
        %s472 = sand.u32 %s39, 1
        %s473 = scalar_lea.sflag [#allocation10], %s472
        %s474 = sand.u32 %s115, 1
        %s475 = scalar_lea.vmem [#allocation11], %s474
        %p476 = pneg %p128
        %p477 = pneg %p125
        %s478 = sand.u32 %s39, 1
        %s479 = scalar_lea.sflag [#allocation13], %s478
        %s480 = sand.u32 %s143, 1
        %s481 = smul.addr %s480, 64
        %s482 = scalar_lea.vmem [#allocation12], %s481
        %p483 = pneg %p156
        %p484 = pneg %p153
        %s485 = sand.u32 %s39, 1
        %s486 = scalar_lea.sflag [#allocation13], %s485
        %s487 = sand.u32 %s171, 1
        %s488 = scalar_lea.vmem [#allocation14], %s487
        %p489 = pneg %p184
        %p490 = pneg %p181
        %s491 = sand.u32 %s199, 1
        %s492 = scalar_lea.sflag [#allocation16], %s491
        %s493 = sand.u32 %s199, 1
        %s494 = smul.addr %s493, 128
        %s495 = scalar_lea.vmem [#allocation15], %s494
        %p496 = pneg %p212
        %p497 = pneg %p209
        %s498 = sld [smem:[#allocation4 + %s44]]
        %p499 = scmp.lt.s32.totalorder %s498, 4
        %s500 = scalar_select %p499, %s498, 4
        %s501 = smul.addr %s500, 2
        %s502 = scalar_lea.vmem %s8, %s501
        %p503 = pneg %p240
        %p504 = pneg %p237
        %p505 = pneg %p266
        %p506 = pneg %p263
        %s507 = sld [smem:[#allocation4 + %s44]]
        %s508 = sld [smem:[#allocation4 + %s44]]
        %s509 = sld [smem:[#allocation4 + %s44]]
        %s510 = sld [smem:[#allocation4 + %s44]]
        %s511 = sld [smem:[#allocation4 + %s44]]
        %s512 = sld [smem:[#allocation4 + %s44]]
        %p513 = scmp.lt.s32.totalorder %s512, 4
        %s514 = scalar_select %p513, %s512, 4
        %s515 = smul.addr %s514, 2
        %s516 = scalar_lea.vmem %s8, %s515
        %s517 = sld [smem:[#allocation4 + %s44]]
        %p519 = scmp.eq.s32.totalorder %s44, 0
        // Predicated region
        $region73: #{tpu_custom_call.1} parent=47 // pred_check
          %p520 = pneg %p519
        $region74: #{tpu_custom_call.1} parent=47 // pred_check_branch
          %522 = sbr.rel (%p520) target = $region76
        $region75: #{tpu_custom_call.1} parent=47 // pred_region
          %v523 = vld [vmem:[#allocation6] sm:$0xff]
          %524 = vst [vmem:[#allocation2] sm:$0xff] %v523
          %525 = vst [vmem:[#allocation17] sm:$0xff] 0.0
        $region76: #{tpu_custom_call.1} parent=47 // pred_fallthru
          _
        %v526 = vld [vmem:[#allocation2] sm:$0xff]
        %v527 = vld [vmem:[%s424] sm:$0xf]
        %v528 = vld [vmem:[%s424 + $0x4] sm:$0xf]
        %v529 = vld [vmem:[%s424 + $0x8] sm:$0xf]
        %v530 = vld [vmem:[%s424 + $0xc] sm:$0xf]
        %v531 = vld [vmem:[%s424 + $0x10] sm:$0xf]
        %v532 = vld [vmem:[%s424 + $0x14] sm:$0xf]
        %v533 = vld [vmem:[%s424 + $0x18] sm:$0xf]
        %v534 = vld [vmem:[%s424 + $0x1c] sm:$0xf]
        %v535 = vld [vmem:[%s424 + $0x20] sm:$0xf]
        %v536 = vld [vmem:[%s424 + $0x24] sm:$0xf]
        %v537 = vld [vmem:[%s424 + $0x28] sm:$0xf]
        %v538 = vld [vmem:[%s424 + $0x2c] sm:$0xf]
        %v539 = vld [vmem:[%s424 + $0x30] sm:$0xf]
        %v540 = vld [vmem:[%s424 + $0x34] sm:$0xf]
        %v541 = vld [vmem:[%s424 + $0x38] sm:$0xf]
        %v542 = vld [vmem:[%s424 + $0x3c] sm:$0xf]
        %v543 = vld [vmem:[%s432] sm:$0x1]
        %v544 = vpack.c.bf16 %v526, %v526
        %v546 = vlaneseq
        %v547 = vshrl.u32 %v546, 7
        %v548 = vsub.s32 0, %v547
        %v549 = vrot.slane %v543, %v548
        %v567 = vunpack.c.l.b16 %v527
        %v568 = vunpack.c.l.b16 %v528
        %v569 = vunpack.c.l.b16 %v529
        %v570 = vunpack.c.l.b16 %v530
        %v571 = vunpack.c.l.b16 %v531
        %v572 = vunpack.c.l.b16 %v532
        %v573 = vunpack.c.l.b16 %v533
        %v574 = vunpack.c.l.b16 %v534
        %v575 = vunpack.c.l.b16 %v535
        %v576 = vunpack.c.l.b16 %v536
        %v577 = vunpack.c.l.b16 %v537
        %v578 = vunpack.c.l.b16 %v538
        %v579 = vunpack.c.l.b16 %v539
        %v580 = vunpack.c.l.b16 %v540
        %v581 = vunpack.c.l.b16 %v541
        %v582 = vunpack.c.l.b16 %v542
        %v583 = vpack.c.b16 %v568, %v567
        %v584 = vpack.c.b16 %v570, %v569
        %v585 = vpack.c.b16 %v572, %v571
        %v586 = vpack.c.b16 %v574, %v573
        %v587 = vpack.c.b16 %v576, %v575
        %v588 = vpack.c.b16 %v578, %v577
        %v589 = vpack.c.b16 %v580, %v579
        %v590 = vpack.c.b16 %v582, %v581
        %599 = vmatprep.subr.bf16.mxu0 0
        %600 = vmatpush1.bf16.msra.mxu0 %v590
        %601 = vmatprep.subr.bf16.mxu0 0
        %602 = vmatpush1.bf16.msra.mxu0 %v589
        %603 = vmatprep.subr.bf16.mxu0 0
        %604 = vmatpush1.bf16.msra.mxu0 %v588
        %605 = vmatprep.subr.bf16.mxu0 0
        %606 = vmatpush1.bf16.msra.mxu0 %v587
        %607 = vmatprep.subr.bf16.mxu0 0
        %608 = vmatpush1.bf16.msra.mxu0 %v586
        %609 = vmatprep.subr.bf16.mxu0 0
        %610 = vmatpush1.bf16.msra.mxu0 %v585
        %611 = vmatprep.subr.bf16.mxu0 0
        %612 = vmatpush1.bf16.msra.mxu0 %v584
        %613 = vmatprep.subr.bf16.mxu0 0
        %614 = vmatpush1.bf16.msra.mxu0 %v583
        %615 = vmatprep.subr.bf16.mxu0 0
        %616 = vmatpush2.bf16.msra.mxu0 0
        %617 = vmatprep.subr.bf16.mxu0 0
        %618 = vmatpush2.bf16.msra.mxu0 0
        %619 = vmatprep.subr.bf16.mxu0 0
        %620 = vmatpush2.bf16.msra.mxu0 0
        %621 = vmatprep.subr.bf16.mxu0 0
        %622 = vmatpush2.bf16.msra.mxu0 0
        %623 = vmatprep.subr.bf16.mxu0 0
        %624 = vmatpush2.bf16.msra.mxu0 0
        %625 = vmatprep.subr.bf16.mxu0 0
        %626 = vmatpush2.bf16.msra.mxu0 0
        %627 = vmatprep.subr.bf16.mxu0 0
        %628 = vmatpush2.bf16.msra.mxu0 0
        %629 = vmatprep.subr.bf16.mxu0 0
        %630 = vmatpush2.bf16.msra.mxu0 0
        %631 = vmatprep.mubr.bf16.mxu0 0
        %632 = vmatmul.mubr.bf16.gmra.mxu0 %v544
        %v633 = vpop.f32.mrf.mxu0
        %v634 = vadd.f32 %v549, %v633
        %v635 = vpop.f32.mrf.mxu0
        %v636 = vpop.f32.mrf.mxu0
        %v637 = vpop.f32.mrf.mxu0
        %638 = vdwg.mxu0
        %v639 = vmax.f32 %v634, 0.0
        %v640 = vld [vmem:[%s441] sm:$0xf]
        %v641 = vld [vmem:[%s441 + $0x4] sm:$0xf]
        %v642 = vld [vmem:[%s441 + $0x8] sm:$0xf]
        %v643 = vld [vmem:[%s441 + $0xc] sm:$0xf]
        %v644 = vld [vmem:[%s441 + $0x10] sm:$0xf]
        %v645 = vld [vmem:[%s441 + $0x14] sm:$0xf]
        %v646 = vld [vmem:[%s441 + $0x18] sm:$0xf]
        %v647 = vld [vmem:[%s441 + $0x1c] sm:$0xf]
        %v648 = vld [vmem:[%s441 + $0x20] sm:$0xf]
        %v649 = vld [vmem:[%s441 + $0x24] sm:$0xf]
        %v650 = vld [vmem:[%s441 + $0x28] sm:$0xf]
        %v651 = vld [vmem:[%s441 + $0x2c] sm:$0xf]
        %v652 = vld [vmem:[%s441 + $0x30] sm:$0xf]
        %v653 = vld [vmem:[%s441 + $0x34] sm:$0xf]
        %v654 = vld [vmem:[%s441 + $0x38] sm:$0xf]
        %v655 = vld [vmem:[%s441 + $0x3c] sm:$0xf]
        %v656 = vld [vmem:[%s449] sm:$0x1]
        %v657 = vpack.c.bf16 %v639, %v639
        %v659 = vlaneseq
        %v660 = vshrl.u32 %v659, 7
        %v661 = vsub.s32 0, %v660
        %v662 = vrot.slane %v656, %v661
        %v680 = vunpack.c.l.b16 %v640
        %v681 = vunpack.c.l.b16 %v641
        %v682 = vunpack.c.l.b16 %v642
        %v683 = vunpack.c.l.b16 %v643
        %v684 = vunpack.c.l.b16 %v644
        %v685 = vunpack.c.l.b16 %v645
        %v686 = vunpack.c.l.b16 %v646
        %v687 = vunpack.c.l.b16 %v647
        %v688 = vunpack.c.l.b16 %v648
        %v689 = vunpack.c.l.b16 %v649
        %v690 = vunpack.c.l.b16 %v650
        %v691 = vunpack.c.l.b16 %v651
        %v692 = vunpack.c.l.b16 %v652
        %v693 = vunpack.c.l.b16 %v653
        %v694 = vunpack.c.l.b16 %v654
        %v695 = vunpack.c.l.b16 %v655
        %v696 = vpack.c.b16 %v681, %v680
        %v697 = vpack.c.b16 %v683, %v682
        %v698 = vpack.c.b16 %v685, %v684
        %v699 = vpack.c.b16 %v687, %v686
        %v700 = vpack.c.b16 %v689, %v688
        %v701 = vpack.c.b16 %v691, %v690
        %v702 = vpack.c.b16 %v693, %v692
        %v703 = vpack.c.b16 %v695, %v694
        %712 = vmatprep.subr.bf16.mxu0 0
        %713 = vmatpush1.bf16.msra.mxu0 %v703
        %714 = vmatprep.subr.bf16.mxu0 0
        %715 = vmatpush1.bf16.msra.mxu0 %v702
        %716 = vmatprep.subr.bf16.mxu0 0
        %717 = vmatpush1.bf16.msra.mxu0 %v701
        %718 = vmatprep.subr.bf16.mxu0 0
        %719 = vmatpush1.bf16.msra.mxu0 %v700
        %720 = vmatprep.subr.bf16.mxu0 0
        %721 = vmatpush1.bf16.msra.mxu0 %v699
        %722 = vmatprep.subr.bf16.mxu0 0
        %723 = vmatpush1.bf16.msra.mxu0 %v698
        %724 = vmatprep.subr.bf16.mxu0 0
        %725 = vmatpush1.bf16.msra.mxu0 %v697
        %726 = vmatprep.subr.bf16.mxu0 0
        %727 = vmatpush1.bf16.msra.mxu0 %v696
        %728 = vmatprep.subr.bf16.mxu0 0
        %729 = vmatpush2.bf16.msra.mxu0 0
        %730 = vmatprep.subr.bf16.mxu0 0
        %731 = vmatpush2.bf16.msra.mxu0 0
        %732 = vmatprep.subr.bf16.mxu0 0
        %733 = vmatpush2.bf16.msra.mxu0 0
        %734 = vmatprep.subr.bf16.mxu0 0
        %735 = vmatpush2.bf16.msra.mxu0 0
        %736 = vmatprep.subr.bf16.mxu0 0
        %737 = vmatpush2.bf16.msra.mxu0 0
        %738 = vmatprep.subr.bf16.mxu0 0
        %739 = vmatpush2.bf16.msra.mxu0 0
        %740 = vmatprep.subr.bf16.mxu0 0
        %741 = vmatpush2.bf16.msra.mxu0 0
        %742 = vmatprep.subr.bf16.mxu0 0
        %743 = vmatpush2.bf16.msra.mxu0 0
        %744 = vmatprep.mubr.bf16.mxu0 0
        %745 = vmatmul.mubr.bf16.gmra.mxu0 %v657
        %v746 = vpop.f32.mrf.mxu0
        %v747 = vadd.f32 %v662, %v746
        %v748 = vpop.f32.mrf.mxu0
        %v749 = vpop.f32.mrf.mxu0
        %v750 = vpop.f32.mrf.mxu0
        %751 = vdwg.mxu0
        %v752 = vmax.f32 %v747, 0.0
        %v753 = vld [vmem:[%s458] sm:$0xff]
        %v754 = vld [vmem:[%s458 + $0x8] sm:$0xff]
        %v755 = vld [vmem:[%s458 + $0x10] sm:$0xff]
        %v756 = vld [vmem:[%s458 + $0x18] sm:$0xff]
        %v757 = vld [vmem:[%s458 + $0x20] sm:$0xff]
        %v758 = vld [vmem:[%s458 + $0x28] sm:$0xff]
        %v759 = vld [vmem:[%s458 + $0x30] sm:$0xff]
        %v760 = vld [vmem:[%s458 + $0x38] sm:$0xff]
        %v761 = vld [vmem:[%s458 + $0x40] sm:$0xff]
        %v762 = vld [vmem:[%s458 + $0x48] sm:$0xff]
        %v763 = vld [vmem:[%s458 + $0x50] sm:$0xff]
        %v764 = vld [vmem:[%s458 + $0x58] sm:$0xff]
        %v765 = vld [vmem:[%s458 + $0x60] sm:$0xff]
        %v766 = vld [vmem:[%s458 + $0x68] sm:$0xff]
        %v767 = vld [vmem:[%s458 + $0x70] sm:$0xff]
        %v768 = vld [vmem:[%s458 + $0x78] sm:$0xff]
        %v769 = vld [vmem:[%s516] sm:$0x3]
        %v770 = vpack.c.bf16 %v752, %v752
        %v772 = vlaneseq
        %v773 = vshrl.u32 %v772, 7
        %v774 = vsub.s32 0, %v773
        %v775 = vrot.slane %v769, %v774
        %v776 = vlaneseq
        %v777 = vshrl.u32 %v776, 7
        %v778 = vsub.s32 1, %v777
        %v779 = vrot.slane %v769, %v778
        %v798 = vunpack.c.l.b16 %v753
        %v799 = vunpack.c.h.b16 %v753
        %v800 = vunpack.c.l.b16 %v754
        %v801 = vunpack.c.h.b16 %v754
        %v802 = vunpack.c.l.b16 %v755
        %v803 = vunpack.c.h.b16 %v755
        %v804 = vunpack.c.l.b16 %v756
        %v805 = vunpack.c.h.b16 %v756
        %v806 = vunpack.c.l.b16 %v757
        %v807 = vunpack.c.h.b16 %v757
        %v808 = vunpack.c.l.b16 %v758
        %v809 = vunpack.c.h.b16 %v758
        %v810 = vunpack.c.l.b16 %v759
        %v811 = vunpack.c.h.b16 %v759
        %v812 = vunpack.c.l.b16 %v760
        %v813 = vunpack.c.h.b16 %v760
        %v814 = vunpack.c.l.b16 %v761
        %v815 = vunpack.c.h.b16 %v761
        %v816 = vunpack.c.l.b16 %v762
        %v817 = vunpack.c.h.b16 %v762
        %v818 = vunpack.c.l.b16 %v763
        %v819 = vunpack.c.h.b16 %v763
        %v820 = vunpack.c.l.b16 %v764
        %v821 = vunpack.c.h.b16 %v764
        %v822 = vunpack.c.l.b16 %v765
        %v823 = vunpack.c.h.b16 %v765
        %v824 = vunpack.c.l.b16 %v766
        %v825 = vunpack.c.h.b16 %v766
        %v826 = vunpack.c.l.b16 %v767
        %v827 = vunpack.c.h.b16 %v767
        %v828 = vunpack.c.l.b16 %v768
        %v829 = vunpack.c.h.b16 %v768
        %v830 = vpack.c.b16 %v800, %v798
        %v831 = vpack.c.b16 %v801, %v799
        %v832 = vpack.c.b16 %v804, %v802
        %v833 = vpack.c.b16 %v805, %v803
        %v834 = vpack.c.b16 %v808, %v806
        %v835 = vpack.c.b16 %v809, %v807
        %v836 = vpack.c.b16 %v812, %v810
        %v837 = vpack.c.b16 %v813, %v811
        %v838 = vpack.c.b16 %v816, %v814
        %v839 = vpack.c.b16 %v817, %v815
        %v840 = vpack.c.b16 %v820, %v818
        %v841 = vpack.c.b16 %v821, %v819
        %v842 = vpack.c.b16 %v824, %v822
        %v843 = vpack.c.b16 %v825, %v823
        %v844 = vpack.c.b16 %v828, %v826
        %v845 = vpack.c.b16 %v829, %v827
        %862 = vmatprep.subr.bf16.mxu0 %v845
        %863 = vmatpush1.bf16.msra.mxu0 %v844
        %864 = vmatprep.subr.bf16.mxu0 %v843
        %865 = vmatpush1.bf16.msra.mxu0 %v842
        %866 = vmatprep.subr.bf16.mxu0 %v841
        %867 = vmatpush1.bf16.msra.mxu0 %v840
        %868 = vmatprep.subr.bf16.mxu0 %v839
        %869 = vmatpush1.bf16.msra.mxu0 %v838
        %870 = vmatprep.subr.bf16.mxu0 %v837
        %871 = vmatpush1.bf16.msra.mxu0 %v836
        %872 = vmatprep.subr.bf16.mxu0 %v835
        %873 = vmatpush1.bf16.msra.mxu0 %v834
        %874 = vmatprep.subr.bf16.mxu0 %v833
        %875 = vmatpush1.bf16.msra.mxu0 %v832
        %876 = vmatprep.subr.bf16.mxu0 %v831
        %877 = vmatpush1.bf16.msra.mxu0 %v830
        %878 = vmatprep.subr.bf16.mxu0 0
        %879 = vmatpush2.bf16.msra.mxu0 0
        %880 = vmatprep.subr.bf16.mxu0 0
        %881 = vmatpush2.bf16.msra.mxu0 0
        %882 = vmatprep.subr.bf16.mxu0 0
        %883 = vmatpush2.bf16.msra.mxu0 0
        %884 = vmatprep.subr.bf16.mxu0 0
        %885 = vmatpush2.bf16.msra.mxu0 0
        %886 = vmatprep.subr.bf16.mxu0 0
        %887 = vmatpush2.bf16.msra.mxu0 0
        %888 = vmatprep.subr.bf16.mxu0 0
        %889 = vmatpush2.bf16.msra.mxu0 0
        %890 = vmatprep.subr.bf16.mxu0 0
        %891 = vmatpush2.bf16.msra.mxu0 0
        %892 = vmatprep.subr.bf16.mxu0 0
        %893 = vmatpush2.bf16.msra.mxu0 0
        %894 = vmatprep.mubr.bf16.mxu0 0
        %895 = vmatmul.mubr.bf16.gmra.mxu0 %v770
        %v896 = vpop.f32.mrf.mxu0
        %v897 = vadd.f32 %v775, %v896
        %v898 = vpop.f32.mrf.mxu0
        %v899 = vadd.f32 %v779, %v898
        %v900 = vpop.f32.mrf.mxu0
        %v901 = vpop.f32.mrf.mxu0
        %902 = vdwg.mxu0
        %v903 = vld [vmem:[#allocation17] sm:$0xff]
        %v904 = vadd.f32 %v903, %v899
        %905 = vst [vmem:[#allocation17] sm:$0xff] %v904
        %s906 = sld [smem:[#allocation5 + %s44]]
        %p907 = scmp.eq.s32.totalorder %s906, 0
        // Predicated region
        $region77: #{tpu_custom_call.1} parent=47 // pred_check
          %p908 = pneg %p907
        $region78: #{tpu_custom_call.1} parent=47 // pred_check_branch
          %910 = sbr.rel (%p908) target = $region80
        $region79: #{tpu_custom_call.1} parent=47 // pred_region
          %v911 = vld [vmem:[#allocation2] sm:$0xff]
          %v912 = vsub.f32 %v911, %v897
          %913 = vst [vmem:[#allocation2] sm:$0xff] %v912
        $region80: #{tpu_custom_call.1} parent=47 // pred_fallthru
          _
        %p914 = scmp.eq.s32.totalorder %s906, 1
        // Predicated region
        $region81: #{tpu_custom_call.1} parent=47 // pred_check
          %p915 = pneg %p914
        $region82: #{tpu_custom_call.1} parent=47 // pred_check_branch
          %917 = sbr.rel (%p915) target = $region84
        $region83: #{tpu_custom_call.1} parent=47 // pred_region
          %918 = vst [vmem:[#allocation2] sm:$0xff] %v897
        $region84: #{tpu_custom_call.1} parent=47 // pred_fallthru
          _
        // Predicated region
        $region85: #{tpu_custom_call.1} parent=47 // pred_check
          %p919 = pneg %p263
        $region86: #{tpu_custom_call.1} parent=47 // pred_check_branch
          %921 = sbr.rel (%p919) target = $region88
        $region87: #{tpu_custom_call.1} parent=47 // pred_region
          %s923 = ssub.s32 128, 128
          %924 = vsyncadd [#allocation8], %s923
          %s925 = smul.addr %s43, 128
          %s926 = scalar_lea.hbm %s9, %s925
          %s928 = sshll.u32 [#allocation17], 4
          %s929 = int_to_ptr.vmem [resolvable:$true] %s928
          %931 = dma.vmem_to_hbm [thread:$0]  %s929, 128, %s926, [#allocation8]
        $region88: #{tpu_custom_call.1} parent=47 // pred_fallthru
          _
        // Predicated region
        $region89: #{tpu_custom_call.1} parent=47 // pred_check
          %p932 = pneg %p263
        $region90: #{tpu_custom_call.1} parent=47 // pred_check_branch
          %934 = sbr.rel (%p932) target = $region92
        $region91: #{tpu_custom_call.1} parent=47 // pred_region
          %935 = dma.done [#allocation8], 128
        $region92: #{tpu_custom_call.1} parent=47 // pred_fallthru
          _
      $region48: #{tpu_custom_call.1} parent=5 // pred_fallthru
        _
      %p936 = scmp.le.s32.totalorder 2, %s34
      // Predicated region
      $region93: #{tpu_custom_call.1} parent=5 // pred_check
        %p937 = pneg %p936
      $region94: #{tpu_custom_call.1} parent=5 // pred_check_branch
        %939 = sbr.rel (%p937) target = $region96
      $region95: #{tpu_custom_call.1} parent=5 // pred_region
        %s940 = ssub.s32 %s34, 2
      $region96: #{tpu_custom_call.1} parent=5 // pred_fallthru
        _
    $region6: #{tpu_custom_call.1} parent=1 // loop_footer
      %s38 = sadd.s32 1, %s34
    $region7: #{tpu_custom_call.1} parent=1 // loop_footer_branch
      %33 = sbr.rel target = $region3
    $region8: #{tpu_custom_call.1} parent=1 // loop_exit
      _
    %941 = vsyncpa [#allocation7], 1
    %s942 = scalar_lea.sflag [#allocation7], 1
    %943 = vsyncpa %s942, 1
    %944 = vsyncpa [#allocation10], 1
    %s945 = scalar_lea.sflag [#allocation10], 1
    %946 = vsyncpa %s945, 1
    %947 = vsyncpa [#allocation13], 1
    %s948 = scalar_lea.sflag [#allocation13], 1
    %949 = vsyncpa %s948, 1
    %950 = vsyncpa [#allocation16], 1
    %s951 = scalar_lea.sflag [#allocation16], 1
    %952 = vsyncpa %s951, 1
    %953 = vsyncpa [#allocation8], 1
    %s954 = scalar_lea.sflag [#allocation8], 1
    %955 = vsyncpa %s954, 1

</llo_original>
